<compile_context>
chip_gen: v7x
topology: tpu7x:2x2x1
jax: 0.10.0
libtpu: 0.0.40
codegen_flags: <defaults>
</compile_context>

<pallas_src>
import jax
import jax.numpy as jnp
from jax.experimental import pallas as pl
from jax.experimental.pallas import tpu as pltpu

LANE = 128
TARGET_BLOCK_BYTES = 2 * 1024 * 1024   # ~2 MiB per block; x~4 with double buffering


def _make_taylor_kernel(order: int, out_dtype):
    # Accumulate in f32 when the I/O dtype is narrower (e.g. bf16): the kernel
    # stays HBM-bound, and this avoids redundant per-op converts on v5e.
    acc_dtype = jnp.float32 if jnp.dtype(out_dtype).itemsize < 4 else jnp.dtype(out_dtype)

    def kernel(coef_ref, x_ref, o_ref):
        # coef_ref: SMEM (order+1,) scalars; x_ref/o_ref: VMEM (tm, W) tiles.
        x = x_ref[...].astype(acc_dtype)
        if order == 0:
            value = jnp.full(x.shape, coef_ref[0], dtype=acc_dtype)
        else:
            # Horner, statically unrolled; start directly from the first FMA.
            value = x * coef_ref[order] + coef_ref[order - 1]
            for i in range(order - 2, -1, -1):
                value = value * x + coef_ref[i]
        o_ref[...] = value.astype(o_ref.dtype)

    return kernel


def taylor_basis_function(x: jax.Array, coefficients: jax.Array) -> jax.Array:
    """Elementwise Taylor/Horner polynomial of x using `coefficients` (order+1,)."""
    order = coefficients.shape[0] - 1
    orig_shape = x.shape
    orig_dtype = x.dtype
    itemsize = jnp.dtype(orig_dtype).itemsize

    # --- Flatten to a lane-dense 2D slab, padding only when unavoidable. ---
    flat = x.reshape(-1)
    total = flat.shape[0]
    pad = (-total) % LANE
    if pad:
        flat = jnp.pad(flat, (0, pad))
    padded_total = total + pad

    # Widest lane axis (multiple of 128) that divides the element count.
    W = LANE
    for cand in (4096, 2048, 1024, 512, 256):
        if padded_total % cand == 0:
            W = cand
            break
    rows = padded_total // W
    x2d = flat.reshape(rows, W)

    # --- Block size: ~TARGET_BLOCK_BYTES, rows-per-block a multiple of 8. ---
    tm = TARGET_BLOCK_BYTES // (W * itemsize)
    tm = max(8, (tm // 8) * 8)
    if rows <= tm:
        # Single block covering the whole array (block_shape == array shape).
        tm = rows
    grid = (pl.cdiv(rows, tm),)

    out2d = pl.pallas_call(
        _make_taylor_kernel(order, orig_dtype),
        out_shape=jax.ShapeDtypeStruct((rows, W), orig_dtype),
        grid_spec=pltpu.PrefetchScalarGridSpec(
            num_scalar_prefetch=1,                          # coefficients -> SMEM
            grid=grid,
            in_specs=[pl.BlockSpec((tm, W), lambda i, coef: (i, 0))],
            out_specs=pl.BlockSpec((tm, W), lambda i, coef: (i, 0)),
        ),
        compiler_params=pltpu.CompilerParams(
            dimension_semantics=("parallel",)),
    )(coefficients, x2d)

    if pad:
        out = out2d.reshape(-1)[:total].reshape(orig_shape)
    else:
        out = out2d.reshape(orig_shape)
    return out


def _reference(x, coefficients):
    order = coefficients.shape[0] - 1
    value = jnp.full_like(x, coefficients[order])
    for i in range(order - 1, -1, -1):
        value = value * x + coefficients[i]
    return value


if __name__ == "__main__":
    key = jax.random.PRNGKey(0)
    k_x, k_c, k_x2 = jax.random.split(key, 3)

    order = 3
    # Deterministic "parameter" init mirroring nn.Parameter(torch.randn(order+1) * 0.1)
    coefficients = jax.random.normal(k_c, (order + 1,), dtype=jnp.float32) * 0.1

    # Small NCHW input, consistent with a conv-style pipeline feeding this basis fn.
    x = jax.random.normal(k_x, (2, 4, 16, 16), dtype=jnp.float32)

    out = taylor_basis_function(x, coefficients)
    out = jax.block_until_ready(out)
    ref = _reference(x, coefficients)
    assert out.shape == x.shape and out.dtype == x.dtype
    assert jnp.allclose(out, ref, atol=1e-6, rtol=1e-6)

    # Odd-sized input to exercise the (rare) padding path.
    x_odd = jax.random.normal(k_x2, (3, 5, 7, 11), dtype=jnp.float32)
    out_odd = jax.block_until_ready(taylor_basis_function(x_odd, coefficients))
    assert out_odd.shape == x_odd.shape
    assert jnp.allclose(out_odd, _reference(x_odd, coefficients), atol=1e-6, rtol=1e-6)

    print("KERNEL_OK")
</pallas_src>

<mosaic_0001>
module attributes {stable_mosaic.version = 11 : i64} {
  func.func @kernel(%arg0: i32, %arg1: memref<4xf32, #tpu.memory_space<smem>>, %arg2: memref<1x2048xf32, #tpu.memory_space<vmem>>, %arg3: memref<1x2048xf32, #tpu.memory_space<vmem>>) attributes {dimension_semantics = [#tpu.dimension_semantics<parallel>], iteration_bounds = array<i64: 1>, scalar_prefetch = 1 : i64, scratch_operands = 0 : i64, tpu.core_type = #tpu.core_type<tc>, window_params = [{transform_indices = @transform_0, window_bounds = array<i64: 1, 2048>}, {transform_indices = @transform_1, window_bounds = array<i64: 1, 2048>}]} {
    %c0 = arith.constant 0 : index
    %c0_0 = arith.constant 0 : index
    %0 = vector.load %arg2[%c0, %c0_0] : memref<1x2048xf32, #tpu.memory_space<vmem>>, vector<1x2048xf32>
    %c3 = arith.constant 3 : index
    %1 = memref.load %arg1[%c3] : memref<4xf32, #tpu.memory_space<smem>>
    %2 = vector.broadcast %1 : f32 to vector<1x2048xf32>
    %3 = arith.mulf %0, %2 : vector<1x2048xf32>
    %c2 = arith.constant 2 : index
    %4 = memref.load %arg1[%c2] : memref<4xf32, #tpu.memory_space<smem>>
    %5 = vector.broadcast %4 : f32 to vector<1x2048xf32>
    %6 = arith.addf %3, %5 : vector<1x2048xf32>
    %7 = arith.mulf %6, %0 : vector<1x2048xf32>
    %c1 = arith.constant 1 : index
    %8 = memref.load %arg1[%c1] : memref<4xf32, #tpu.memory_space<smem>>
    %9 = vector.broadcast %8 : f32 to vector<1x2048xf32>
    %10 = arith.addf %7, %9 : vector<1x2048xf32>
    %11 = arith.mulf %10, %0 : vector<1x2048xf32>
    %c0_1 = arith.constant 0 : index
    %12 = memref.load %arg1[%c0_1] : memref<4xf32, #tpu.memory_space<smem>>
    %13 = vector.broadcast %12 : f32 to vector<1x2048xf32>
    %14 = arith.addf %11, %13 : vector<1x2048xf32>
    %c0_2 = arith.constant 0 : index
    %c0_3 = arith.constant 0 : index
    %15 = vector.load %arg3[%c0_2, %c0_3] : memref<1x2048xf32, #tpu.memory_space<vmem>>, vector<1x2048xf32>
    tpu.vector_store %arg3[%c0_2, %c0_3], %14 {strides = array<i32>} : memref<1x2048xf32, #tpu.memory_space<vmem>>, vector<1x2048xf32>,
    return
  }
  func.func @transform_0(%arg0: i32, %arg1: memref<4xf32, #tpu.memory_space<smem>>) -> (i32, i32) {
    %c0_i32 = arith.constant 0 : i32
    %c0_i32_0 = arith.constant 0 : i32
    return %arg0, %c0_i32 : i32, i32
  }
  func.func @transform_1(%arg0: i32, %arg1: memref<4xf32, #tpu.memory_space<smem>>) -> (i32, i32) {
    %c0_i32 = arith.constant 0 : i32
    %c0_i32_0 = arith.constant 0 : i32
    return %arg0, %c0_i32 : i32, i32
  }
}

</mosaic_0001>

<llo_original>
// kernel: tpu_custom_call.1
$region0: #{tpu_custom_call.1}
  #allocation0 [shape = 'u32[]', space=smem, size = 0x4, offset = 0x4, fixed_abs, tag = 'smem constant byte address 0x4 - core index']
  #allocation1 [shape = 'u32[144,128]{1,0:T(1,128)}', space=vmem, size = 0x12000, scoped, tag = 'internal scratch']
  #allocation2 [shape = 's32[1]{0}', space=sflag, size = 0x4, scoped, tag = 'scoped memory for tpu_custom_call.1']
  #allocation3 [shape = 'u8[512]{0}', space=smem, size = 0x200, scoped, tag = 'prefetched SMEM operand 0']
  %s0 = inlined_call_operand.hbm [shape: f32[4], index: 0, kind: input, shape index: {}]
  %s1 = inlined_call_operand.hbm [shape: f32[1,2048], index: 1, kind: input, shape index: {}]
  %s2 = inlined_call_operand.hbm [shape: f32[1,2048], index: 2, kind: output, shape index: {}]
  %s3 = sld [smem:[#allocation0]]
  $region18: #{tpu_custom_call.1} parent=0
    _
  %s5 = ssub.s32 1, %s3
  %s6 = scalar_select 0, %s5, %s3
  %8 = dma.hbm_to_smem %s0, 16, [#allocation3], [#allocation2]
  %9 = dma.done [#allocation2], 16
  %10 = sfence
  $region1: #{tpu_custom_call.1} parent=0
    #allocation4 [shape = 'u8[8192]{0}', space=vmem, size = 0x2000, scoped, tag = 'input window, operand 1, single buffered']
    #allocation5 [shape = 's32[1]{0}', space=sflag, size = 0x4, scoped, tag = 'scoped memory for tpu_custom_call.1']
    #allocation6 [shape = 's32[1]{0}', space=sflag, size = 0x4, scoped, tag = 'scoped memory for tpu_custom_call.1']
    #allocation7 [shape = 'u8[8192]{0}', space=vmem, size = 0x2000, scoped, tag = 'output window, operand 0, single buffered']
    %11 = vsyncpa [#allocation5], 0
    %12 = vsyncpa [#allocation6], 0
    // Predicated region
    $region2: #{tpu_custom_call.1} parent=1 // pred_check
      _
    $region3: #{tpu_custom_call.1} parent=1 // pred_check_branch
      %14 = sbr.rel (0) target = $region5
    $region4: #{tpu_custom_call.1} parent=1 // pred_region
      %s16 = ssub.s32 256, 256
      %17 = vsyncadd [#allocation5], %s16
      %s19 = sshll.u32 [#allocation4], 4
      %s20 = int_to_ptr.vmem [resolvable:$true] %s19
      %22 = dma.hbm_to_vmem [thread:$0]  %s1, 256, %s20, [#allocation5]
    $region5: #{tpu_custom_call.1} parent=1 // pred_fallthru
      _
    // Predicated region
    $region6: #{tpu_custom_call.1} parent=1 // pred_check
      _
    $region7: #{tpu_custom_call.1} parent=1 // pred_check_branch
      %24 = sbr.rel (0) target = $region9
    $region8: #{tpu_custom_call.1} parent=1 // pred_region
      %25 = dma.done [#allocation5], 256
    $region9: #{tpu_custom_call.1} parent=1 // pred_fallthru
      _
    %v26 = vld [vmem:[#allocation4] sm:$0xff]
    %v27 = vld [vmem:[#allocation4 + $0x8] sm:$0xff]
    %s28 = sld [smem:[#allocation3 + $0x3]]
    %v29 = vstv %s28
    %v30 = vmul.f32 %v26, %v29
    %v31 = vmul.f32 %v27, %v29
    %s32 = sld [smem:[#allocation3 + $0x2]]
    %v33 = vstv %s32
    %v34 = vadd.f32 %v30, %v33
    %v35 = vadd.f32 %v31, %v33
    %v36 = vmul.f32 %v34, %v26
    %v37 = vmul.f32 %v35, %v27
    %s38 = sld [smem:[#allocation3 + $0x1]]
    %v39 = vstv %s38
    %v40 = vadd.f32 %v36, %v39
    %v41 = vadd.f32 %v37, %v39
    %v42 = vmul.f32 %v40, %v26
    %v43 = vmul.f32 %v41, %v27
    %s44 = sld [smem:[#allocation3]]
    %v45 = vstv %s44
    %v46 = vadd.f32 %v42, %v45
    %v47 = vadd.f32 %v43, %v45
    %48 = vst [vmem:[#allocation7] sm:$0xff] %v46
    %49 = vst [vmem:[#allocation7 + $0x8] sm:$0xff] %v47
    // Predicated region
    $region10: #{tpu_custom_call.1} parent=1 // pred_check
      _
    $region11: #{tpu_custom_call.1} parent=1 // pred_check_branch
      %51 = sbr.rel (0) target = $region13
    $region12: #{tpu_custom_call.1} parent=1 // pred_region
      %s53 = ssub.s32 256, 256
      %54 = vsyncadd [#allocation6], %s53
      %s56 = sshll.u32 [#allocation7], 4
      %s57 = int_to_ptr.vmem [resolvable:$true] %s56
      %59 = dma.vmem_to_hbm [thread:$0]  %s57, 256, %s2, [#allocation6]
    $region13: #{tpu_custom_call.1} parent=1 // pred_fallthru
      _
    // Predicated region
    $region14: #{tpu_custom_call.1} parent=1 // pred_check
      _
    $region15: #{tpu_custom_call.1} parent=1 // pred_check_branch
      %61 = sbr.rel (0) target = $region17
    $region16: #{tpu_custom_call.1} parent=1 // pred_region
      %62 = dma.done [#allocation6], 256
    $region17: #{tpu_custom_call.1} parent=1 // pred_fallthru
      _
    %63 = vsyncpa [#allocation5], 1
    %64 = vsyncpa [#allocation6], 1

</llo_original>
